<compile_context>
chip_gen: v7x
topology: tpu7x:2x2x1
jax: 0.10.0
libtpu: 0.0.40
codegen_flags: <defaults>
</compile_context>

<pallas_src>
import jax
import jax.numpy as jnp
from jax import lax
from jax.experimental import pallas as pl
from jax.experimental.pallas import tpu as pltpu


def _round_up(a: int, b: int) -> int:
    return ((a + b - 1) // b) * b


def _factorized_reduce_kernel(x_ref, w_ref, b_ref, o_ref):
    # ReLU (elementwise — commutes with the strided pixel gather done in the wrapper)
    x = jnp.maximum(x_ref[...], 0.0)
    # Both 1x1 stride-2 convs + BN scale folded into one block-diagonal weight (MXU)
    y = jnp.dot(x, w_ref[...], preferred_element_type=jnp.float32)
    # BN shift folded into a single bias row
    o_ref[...] = (y + b_ref[...]).astype(o_ref.dtype)


def factorized_reduce(x, w1, w2, gamma, beta, run_mean, run_var,
                      *, eps=1e-5, tm=1024):
    """x: NCHW float32. w1: [C_in, C1], w2: [C_in, C2] (1x1 conv weights, transposed)."""
    N, C_in, H, W = x.shape
    C1 = w1.shape[1]
    C2 = w2.shape[1]
    C_out = C1 + C2
    assert H % 2 == 0 and W % 2 == 0, "FactorizedReduce concat needs even H, W"
    Ho, Wo = H // 2, W // 2
    M = N * Ho * Wo
    K = 2 * C_in

    # ---- wrapper glue: one NCHW->NHWC pass, fused strided slices + channel concat ----
    x_nhwc = jnp.transpose(x, (0, 2, 3, 1))                 # [N, H, W, C_in]
    xa = x_nhwc[:, 0::2, 0::2, :]                           # even/even pixels
    xb = x_nhwc[:, 1::2, 1::2, :]                           # odd/odd pixels
    x_rows = jnp.concatenate([xa, xb], axis=-1).reshape(M, K)   # [M, 2*C_in]

    # ---- fold BatchNorm (inference) into the conv weights + a bias ----
    scale = gamma * lax.rsqrt(run_var + eps)                # [C_out]
    bias = beta - run_mean * scale                          # [C_out]
    w1f = w1 * scale[:C1]                                   # [C_in, C1]
    w2f = w2 * scale[C1:]                                   # [C_in, C2]

    # ---- block-diagonal combined weight, output channels padded to lane-dense 128k ----
    C_out_pad = _round_up(C_out, 128)
    w_comb = jnp.zeros((K, C_out_pad), dtype=x.dtype)
    w_comb = w_comb.at[:C_in, :C1].set(w1f.astype(x.dtype))
    w_comb = w_comb.at[C_in:, C1:C_out].set(w2f.astype(x.dtype))
    bias_pad = jnp.zeros((1, C_out_pad), dtype=jnp.float32)
    bias_pad = bias_pad.at[0, :C_out].set(bias.astype(jnp.float32))

    # ---- tile selection: big rows tiles, capped so 2x double-buffered blocks fit VMEM ----
    bytes_per_row = 4 * (K + C_out_pad)                     # f32 input row + output row
    vmem_budget = 12 * 1024 * 1024                          # < smallest default scoped limit
    tm_cap = max(8, (vmem_budget // (2 * bytes_per_row)) // 8 * 8)
    tm_eff = min(tm, tm_cap, _round_up(M, 8))
    M_pad = _round_up(M, tm_eff)
    if M_pad != M:
        x_rows = jnp.pad(x_rows, ((0, M_pad - M), (0, 0)))

    grid = (M_pad // tm_eff,)

    out_rows = pl.pallas_call(
        _factorized_reduce_kernel,
        out_shape=jax.ShapeDtypeStruct((M_pad, C_out_pad), x.dtype),
        grid_spec=pltpu.PrefetchScalarGridSpec(
            num_scalar_prefetch=0,
            grid=grid,
            in_specs=[
                pl.BlockSpec((tm_eff, K), lambda i: (i, 0)),          # x rows
                pl.BlockSpec((K, C_out_pad), lambda i: (0, 0)),       # combined weight
                pl.BlockSpec((1, C_out_pad), lambda i: (0, 0)),       # folded BN bias
            ],
            out_specs=pl.BlockSpec((tm_eff, C_out_pad), lambda i: (i, 0)),
        ),
        compiler_params=pltpu.CompilerParams(
            dimension_semantics=("parallel",)),
    )(x_rows, w_comb, bias_pad)

    # rows [M_pad, C_out_pad] -> slice padding off -> NCHW
    out = out_rows[:M, :C_out].reshape(N, Ho, Wo, C_out).transpose(0, 3, 1, 2)
    return out


if __name__ == "__main__":
    # Small shapes consistent with the module: N=2, C_in=4, H=W=16, C_out=8
    N, C_in, H, W = 2, 4, 16, 16
    C_out = 8
    C1 = C_out // 2
    C2 = C_out - C1

    key = jax.random.PRNGKey(0)
    kx, k1, k2, kg, kb = jax.random.split(key, 5)

    x = jax.random.normal(kx, (N, C_in, H, W), dtype=jnp.float32)

    # PyTorch conv weights are (C_out_half, C_in, 1, 1); stored here already
    # transposed to [C_in, C_out_half] for the channel matmul.
    w1 = 0.1 * jax.random.normal(k1, (C_in, C1), dtype=jnp.float32)
    w2 = 0.1 * jax.random.normal(k2, (C_in, C2), dtype=jnp.float32)

    # BatchNorm2d(affine=True) params + running stats (inference mode)
    gamma = 1.0 + 0.05 * jax.random.normal(kg, (C_out,), dtype=jnp.float32)
    beta = 0.05 * jax.random.normal(kb, (C_out,), dtype=jnp.float32)
    run_mean = jnp.zeros((C_out,), dtype=jnp.float32)
    run_var = jnp.ones((C_out,), dtype=jnp.float32)

    out = factorized_reduce(x, w1, w2, gamma, beta, run_mean, run_var)
    out = jax.block_until_ready(out)

    # Pure-JAX reference check (same math as the PyTorch module, no Pallas, no BN fold)
    xr = jnp.maximum(x, 0.0)
    xa = jnp.transpose(xr[:, :, 0::2, 0::2], (0, 2, 3, 1))
    xb = jnp.transpose(xr[:, :, 1::2, 1::2], (0, 2, 3, 1))
    y = jnp.concatenate([xa @ w1, xb @ w2], axis=-1)
    y = (y - run_mean) / jnp.sqrt(run_var + 1e-5) * gamma + beta
    ref = jnp.transpose(y, (0, 3, 1, 2))
    assert out.shape == (N, C_out, H // 2, W // 2)
    assert jnp.allclose(out, ref, atol=1e-4, rtol=1e-4)

    print("KERNEL_OK")
</pallas_src>

<mosaic_0001>
module attributes {stable_mosaic.version = 11 : i64} {
  func.func @_factorized_reduce_kernel(%arg0: i32, %arg1: memref<128x8xf32, #tpu.memory_space<vmem>>, %arg2: memref<8x128xf32, #tpu.memory_space<vmem>>, %arg3: memref<1x128xf32, #tpu.memory_space<vmem>>, %arg4: memref<128x128xf32, #tpu.memory_space<vmem>>) attributes {dimension_semantics = [#tpu.dimension_semantics<parallel>], iteration_bounds = array<i64: 1>, scalar_prefetch = 0 : i64, scratch_operands = 0 : i64, tpu.core_type = #tpu.core_type<tc>, window_params = [{transform_indices = @transform_0, window_bounds = array<i64: 128, 8>}, {pipeline_mode = #tpu.pipeline_mode<synchronous>, transform_indices = @transform_1, window_bounds = array<i64: 8, 128>}, {pipeline_mode = #tpu.pipeline_mode<synchronous>, transform_indices = @transform_2, window_bounds = array<i64: 1, 128>}, {transform_indices = @transform_3, window_bounds = array<i64: 128, 128>}]} {
    %c0 = arith.constant 0 : index
    %c0_0 = arith.constant 0 : index
    %0 = vector.load %arg1[%c0, %c0_0] : memref<128x8xf32, #tpu.memory_space<vmem>>, vector<128x8xf32>
    %cst = arith.constant 0.000000e+00 : f32
    %1 = vector.broadcast %cst : f32 to vector<128x8xf32>
    %2 = arith.maximumf %0, %1 : vector<128x8xf32>
    %c0_1 = arith.constant 0 : index
    %c0_2 = arith.constant 0 : index
    %3 = vector.load %arg2[%c0_1, %c0_2] : memref<8x128xf32, #tpu.memory_space<vmem>>, vector<8x128xf32>
    %cst_3 = arith.constant dense<0.000000e+00> : vector<128x128xf32>
    %4 = tpu.matmul %2, %3, %cst_3 {dimension_numbers = #tpu.dot_dimension_numbers<[1], [0], [0], [1], [0, 0, 1, 1], [], []>} : vector<128x8xf32>, vector<8x128xf32>, vector<128x128xf32> -> vector<128x128xf32>
    %c0_4 = arith.constant 0 : index
    %c0_5 = arith.constant 0 : index
    %5 = vector.load %arg3[%c0_4, %c0_5] : memref<1x128xf32, #tpu.memory_space<vmem>>, vector<1x128xf32>
    %6 = vector.broadcast %5 : vector<1x128xf32> to vector<128x128xf32>
    %7 = arith.addf %4, %6 : vector<128x128xf32>
    %c0_6 = arith.constant 0 : index
    %c0_7 = arith.constant 0 : index
    %8 = vector.load %arg4[%c0_6, %c0_7] : memref<128x128xf32, #tpu.memory_space<vmem>>, vector<128x128xf32>
    tpu.vector_store %arg4[%c0_6, %c0_7], %7 {strides = array<i32>} : memref<128x128xf32, #tpu.memory_space<vmem>>, vector<128x128xf32>,
    return
  }
  func.func @transform_0(%arg0: i32) -> (i32, i32) {
    %c0_i32 = arith.constant 0 : i32
    %c0_i32_0 = arith.constant 0 : i32
    return %arg0, %c0_i32 : i32, i32
  }
  func.func @transform_1(%arg0: i32) -> (i32, i32) {
    %c0_i32 = arith.constant 0 : i32
    %c0_i32_0 = arith.constant 0 : i32
    %c0_i32_1 = arith.constant 0 : i32
    return %c0_i32, %c0_i32_0 : i32, i32
  }
  func.func @transform_2(%arg0: i32) -> (i32, i32) {
    %c0_i32 = arith.constant 0 : i32
    %c0_i32_0 = arith.constant 0 : i32
    %c0_i32_1 = arith.constant 0 : i32
    return %c0_i32, %c0_i32_0 : i32, i32
  }
  func.func @transform_3(%arg0: i32) -> (i32, i32) {
    %c0_i32 = arith.constant 0 : i32
    %c0_i32_0 = arith.constant 0 : i32
    return %arg0, %c0_i32 : i32, i32
  }
}

</mosaic_0001>

<llo_original>
// kernel: tpu_custom_call.1
$region0: #{tpu_custom_call.1}
  #allocation0 [shape = 'u32[]', space=smem, size = 0x4, offset = 0x4, fixed_abs, tag = 'smem constant byte address 0x4 - core index']
  #allocation1 [shape = 'u32[144,128]{1,0:T(1,128)}', space=vmem, size = 0x12000, scoped, tag = 'internal scratch']
  %s0 = inlined_call_operand.vmem [shape: f32[128,8], index: 0, kind: input, shape index: {}]
  %s1 = inlined_call_operand.vmem [shape: f32[8,128], index: 1, kind: input, shape index: {}]
  %s2 = inlined_call_operand.vmem [shape: f32[1,128], index: 2, kind: input, shape index: {}]
  %s3 = inlined_call_operand.hbm [shape: f32[128,128], index: 3, kind: output, shape index: {}]
  %s4 = sld [smem:[#allocation0]]
  $region22: #{tpu_custom_call.1} parent=0
    _
  %s6 = ssub.s32 1, %s4
  %s7 = scalar_select 0, %s6, %s4
  $region1: #{tpu_custom_call.1} parent=0
    #allocation2 [shape = 'u8[65536]{0}', space=vmem, size = 0x10000, scoped, tag = 'output window, operand 0, single buffered']
    #allocation3 [shape = 's32[1]{0}', space=sflag, size = 0x4, scoped, tag = 'scoped memory for tpu_custom_call.1']
    %8 = vsyncpa [#allocation3], 0
    // Predicated region
    $region2: #{tpu_custom_call.1} parent=1 // pred_check
      _
    $region3: #{tpu_custom_call.1} parent=1 // pred_check_branch
      %10 = sbr.rel (0) target = $region5
    $region4: #{tpu_custom_call.1} parent=1 // pred_region
      _
    $region5: #{tpu_custom_call.1} parent=1 // pred_fallthru
      _
    // Predicated region
    $region6: #{tpu_custom_call.1} parent=1 // pred_check
      _
    $region7: #{tpu_custom_call.1} parent=1 // pred_check_branch
      %12 = sbr.rel (0) target = $region9
    $region8: #{tpu_custom_call.1} parent=1 // pred_region
      _
    $region9: #{tpu_custom_call.1} parent=1 // pred_fallthru
      _
    // Predicated region
    $region10: #{tpu_custom_call.1} parent=1 // pred_check
      _
    $region11: #{tpu_custom_call.1} parent=1 // pred_check_branch
      %14 = sbr.rel (0) target = $region13
    $region12: #{tpu_custom_call.1} parent=1 // pred_region
      _
    $region13: #{tpu_custom_call.1} parent=1 // pred_fallthru
      _
    %v15 = vld [vmem:[%s0] sm:$0xff]
    %v16 = vld [vmem:[%s0 + $0x8] sm:$0xff]
    %v17 = vld [vmem:[%s0 + $0x10] sm:$0xff]
    %v18 = vld [vmem:[%s0 + $0x18] sm:$0xff]
    %v19 = vld [vmem:[%s0 + $0x20] sm:$0xff]
    %v20 = vld [vmem:[%s0 + $0x28] sm:$0xff]
    %v21 = vld [vmem:[%s0 + $0x30] sm:$0xff]
    %v22 = vld [vmem:[%s0 + $0x38] sm:$0xff]
    %v23 = vld [vmem:[%s0 + $0x40] sm:$0xff]
    %v24 = vld [vmem:[%s0 + $0x48] sm:$0xff]
    %v25 = vld [vmem:[%s0 + $0x50] sm:$0xff]
    %v26 = vld [vmem:[%s0 + $0x58] sm:$0xff]
    %v27 = vld [vmem:[%s0 + $0x60] sm:$0xff]
    %v28 = vld [vmem:[%s0 + $0x68] sm:$0xff]
    %v29 = vld [vmem:[%s0 + $0x70] sm:$0xff]
    %v30 = vld [vmem:[%s0 + $0x78] sm:$0xff]
    %v31 = vmax.f32 %v15, 0.0
    %v32 = vmax.f32 %v16, 0.0
    %v33 = vmax.f32 %v17, 0.0
    %v34 = vmax.f32 %v18, 0.0
    %v35 = vmax.f32 %v19, 0.0
    %v36 = vmax.f32 %v20, 0.0
    %v37 = vmax.f32 %v21, 0.0
    %v38 = vmax.f32 %v22, 0.0
    %v39 = vmax.f32 %v23, 0.0
    %v40 = vmax.f32 %v24, 0.0
    %v41 = vmax.f32 %v25, 0.0
    %v42 = vmax.f32 %v26, 0.0
    %v43 = vmax.f32 %v27, 0.0
    %v44 = vmax.f32 %v28, 0.0
    %v45 = vmax.f32 %v29, 0.0
    %v46 = vmax.f32 %v30, 0.0
    %v47 = vld [vmem:[%s1] sm:$0xff]
    %v48 = vld [vmem:[%s2] sm:$0x1]
    %v50 = vlaneseq
    %v51 = vshrl.u32 %v50, 7
    %v52 = vsub.s32 0, %v51
    %v53 = vrot.slane %v48, %v52
    %vm55 = vcmask 64512
    %v57 = vsel %vm55, %v31, 0
    %v60 = vsel %vm55, %v32, 0
    %v63 = vsel %vm55, %v33, 0
    %v66 = vsel %vm55, %v34, 0
    %v69 = vsel %vm55, %v35, 0
    %v72 = vsel %vm55, %v36, 0
    %v75 = vsel %vm55, %v37, 0
    %v78 = vsel %vm55, %v38, 0
    %v81 = vsel %vm55, %v39, 0
    %v84 = vsel %vm55, %v40, 0
    %v87 = vsel %vm55, %v41, 0
    %v90 = vsel %vm55, %v42, 0
    %v93 = vsel %vm55, %v43, 0
    %v96 = vsel %vm55, %v44, 0
    %v99 = vsel %vm55, %v45, 0
    %v102 = vsel %vm55, %v46, 0
    %104 = vmatprep.subr.mxu0 0.0
    %105 = vmatpush1.msra.mxu0 %v47
    %106 = vmatprep.subr.mxu0 0.0
    %107 = vmatpush1.msra.mxu0 0.0
    %108 = vmatprep.subr.mxu0 0.0
    %109 = vmatpush1.msra.mxu0 0.0
    %110 = vmatprep.subr.mxu0 0.0
    %111 = vmatpush1.msra.mxu0 0.0
    %112 = vmatprep.subr.mxu0 0.0
    %113 = vmatpush1.msra.mxu0 0.0
    %114 = vmatprep.subr.mxu0 0.0
    %115 = vmatpush1.msra.mxu0 0.0
    %116 = vmatprep.subr.mxu0 0.0
    %117 = vmatpush1.msra.mxu0 0.0
    %118 = vmatprep.subr.mxu0 0.0
    %119 = vmatpush1.msra.mxu0 0.0
    %120 = vmatprep.subr.mxu0 0.0
    %121 = vmatpush1.msra.mxu0 0.0
    %122 = vmatprep.subr.mxu0 0.0
    %123 = vmatpush1.msra.mxu0 0.0
    %124 = vmatprep.subr.mxu0 0.0
    %125 = vmatpush1.msra.mxu0 0.0
    %126 = vmatprep.subr.mxu0 0.0
    %127 = vmatpush1.msra.mxu0 0.0
    %128 = vmatprep.subr.mxu0 0.0
    %129 = vmatpush1.msra.mxu0 0.0
    %130 = vmatprep.subr.mxu0 0.0
    %131 = vmatpush1.msra.mxu0 0.0
    %132 = vmatprep.subr.mxu0 0.0
    %133 = vmatpush1.msra.mxu0 0.0
    %134 = vmatprep.subr.mxu0 0.0
    %135 = vmatpush1.msra.mxu0 0.0
    %136 = vmatprep.subr.mxu0 0.0
    %137 = vmatpush1.msra.mxu0 0.0
    %138 = vmatprep.subr.mxu0 0.0
    %139 = vmatpush1.msra.mxu0 0.0
    %140 = vmatprep.subr.mxu0 0.0
    %141 = vmatpush1.msra.mxu0 0.0
    %142 = vmatprep.subr.mxu0 0.0
    %143 = vmatpush1.msra.mxu0 0.0
    %144 = vmatprep.subr.mxu0 0.0
    %145 = vmatpush1.msra.mxu0 0.0
    %146 = vmatprep.subr.mxu0 0.0
    %147 = vmatpush1.msra.mxu0 0.0
    %148 = vmatprep.subr.mxu0 0.0
    %149 = vmatpush1.msra.mxu0 0.0
    %150 = vmatprep.subr.mxu0 0.0
    %151 = vmatpush1.msra.mxu0 0.0
    %152 = vmatprep.subr.mxu0 0.0
    %153 = vmatpush1.msra.mxu0 0.0
    %154 = vmatprep.subr.mxu0 0.0
    %155 = vmatpush1.msra.mxu0 0.0
    %156 = vmatprep.subr.mxu0 0.0
    %157 = vmatpush1.msra.mxu0 0.0
    %158 = vmatprep.subr.mxu0 0.0
    %159 = vmatpush1.msra.mxu0 0.0
    %160 = vmatprep.subr.mxu0 0.0
    %161 = vmatpush1.msra.mxu0 0.0
    %162 = vmatprep.subr.mxu0 0.0
    %163 = vmatpush1.msra.mxu0 0.0
    %164 = vmatprep.subr.mxu0 0.0
    %165 = vmatpush1.msra.mxu0 0.0
    %166 = vmatprep.subr.mxu0 0.0
    %167 = vmatpush1.msra.mxu0 0.0
    %168 = vmatprep.mubr.f32.mxu0 0.0
    %169 = vmatmul.mubr.f32.gmra.mrb[0].mxu0 %v57
    %v170 = vpop.f32.mrb[0].mxu0
    %v171 = vadd.f32 %v53, %v170
    %v172 = vpop.f32.mrb[0].mxu0
    %173 = vmatprep.mubr.f32.mxu0 0.0
    %174 = vmatmul.mubr.f32.gmra.mrb[0].mxu0 %v60
    %v175 = vpop.f32.mrb[0].mxu0
    %v176 = vadd.f32 %v53, %v175
    %v177 = vpop.f32.mrb[0].mxu0
    %178 = vmatprep.mubr.f32.mxu0 0.0
    %179 = vmatmul.mubr.f32.gmra.mrb[0].mxu0 %v63
    %v180 = vpop.f32.mrb[0].mxu0
    %v181 = vadd.f32 %v53, %v180
    %v182 = vpop.f32.mrb[0].mxu0
    %183 = vmatprep.mubr.f32.mxu0 0.0
    %184 = vmatmul.mubr.f32.gmra.mrb[0].mxu0 %v66
    %v185 = vpop.f32.mrb[0].mxu0
    %v186 = vadd.f32 %v53, %v185
    %v187 = vpop.f32.mrb[0].mxu0
    %188 = vmatprep.mubr.f32.mxu0 0.0
    %189 = vmatmul.mubr.f32.gmra.mrb[0].mxu0 %v69
    %v190 = vpop.f32.mrb[0].mxu0
    %v191 = vadd.f32 %v53, %v190
    %v192 = vpop.f32.mrb[0].mxu0
    %193 = vmatprep.mubr.f32.mxu0 0.0
    %194 = vmatmul.mubr.f32.gmra.mrb[0].mxu0 %v72
    %v195 = vpop.f32.mrb[0].mxu0
    %v196 = vadd.f32 %v53, %v195
    %v197 = vpop.f32.mrb[0].mxu0
    %198 = vmatprep.mubr.f32.mxu0 0.0
    %199 = vmatmul.mubr.f32.gmra.mrb[0].mxu0 %v75
    %v200 = vpop.f32.mrb[0].mxu0
    %v201 = vadd.f32 %v53, %v200
    %v202 = vpop.f32.mrb[0].mxu0
    %203 = vmatprep.mubr.f32.mxu0 0.0
    %204 = vmatmul.mubr.f32.gmra.mrb[0].mxu0 %v78
    %v205 = vpop.f32.mrb[0].mxu0
    %v206 = vadd.f32 %v53, %v205
    %v207 = vpop.f32.mrb[0].mxu0
    %208 = vmatprep.mubr.f32.mxu0 0.0
    %209 = vmatmul.mubr.f32.gmra.mrb[0].mxu0 %v81
    %v210 = vpop.f32.mrb[0].mxu0
    %v211 = vadd.f32 %v53, %v210
    %v212 = vpop.f32.mrb[0].mxu0
    %213 = vmatprep.mubr.f32.mxu0 0.0
    %214 = vmatmul.mubr.f32.gmra.mrb[0].mxu0 %v84
    %v215 = vpop.f32.mrb[0].mxu0
    %v216 = vadd.f32 %v53, %v215
    %v217 = vpop.f32.mrb[0].mxu0
    %218 = vmatprep.mubr.f32.mxu0 0.0
    %219 = vmatmul.mubr.f32.gmra.mrb[0].mxu0 %v87
    %v220 = vpop.f32.mrb[0].mxu0
    %v221 = vadd.f32 %v53, %v220
    %v222 = vpop.f32.mrb[0].mxu0
    %223 = vmatprep.mubr.f32.mxu0 0.0
    %224 = vmatmul.mubr.f32.gmra.mrb[0].mxu0 %v90
    %v225 = vpop.f32.mrb[0].mxu0
    %v226 = vadd.f32 %v53, %v225
    %v227 = vpop.f32.mrb[0].mxu0
    %228 = vmatprep.mubr.f32.mxu0 0.0
    %229 = vmatmul.mubr.f32.gmra.mrb[0].mxu0 %v93
    %v230 = vpop.f32.mrb[0].mxu0
    %v231 = vadd.f32 %v53, %v230
    %v232 = vpop.f32.mrb[0].mxu0
    %233 = vmatprep.mubr.f32.mxu0 0.0
    %234 = vmatmul.mubr.f32.gmra.mrb[0].mxu0 %v96
    %v235 = vpop.f32.mrb[0].mxu0
    %v236 = vadd.f32 %v53, %v235
    %v237 = vpop.f32.mrb[0].mxu0
    %238 = vmatprep.mubr.f32.mxu0 0.0
    %239 = vmatmul.mubr.f32.gmra.mrb[0].mxu0 %v99
    %v240 = vpop.f32.mrb[0].mxu0
    %v241 = vadd.f32 %v53, %v240
    %v242 = vpop.f32.mrb[0].mxu0
    %243 = vmatprep.mubr.f32.mxu0 0.0
    %244 = vmatmul.mubr.f32.gmra.mrb[0].mxu0 %v102
    %v245 = vpop.f32.mrb[0].mxu0
    %v246 = vadd.f32 %v53, %v245
    %v247 = vpop.f32.mrb[0].mxu0
    %248 = vdwg.mxu0
    %249 = vst [vmem:[#allocation2] sm:$0xff] %v171
    %250 = vst [vmem:[#allocation2 + $0x8] sm:$0xff] %v176
    %251 = vst [vmem:[#allocation2 + $0x10] sm:$0xff] %v181
    %252 = vst [vmem:[#allocation2 + $0x18] sm:$0xff] %v186
    %253 = vst [vmem:[#allocation2 + $0x20] sm:$0xff] %v191
    %254 = vst [vmem:[#allocation2 + $0x28] sm:$0xff] %v196
    %255 = vst [vmem:[#allocation2 + $0x30] sm:$0xff] %v201
    %256 = vst [vmem:[#allocation2 + $0x38] sm:$0xff] %v206
    %257 = vst [vmem:[#allocation2 + $0x40] sm:$0xff] %v211
    %258 = vst [vmem:[#allocation2 + $0x48] sm:$0xff] %v216
    %259 = vst [vmem:[#allocation2 + $0x50] sm:$0xff] %v221
    %260 = vst [vmem:[#allocation2 + $0x58] sm:$0xff] %v226
    %261 = vst [vmem:[#allocation2 + $0x60] sm:$0xff] %v231
    %262 = vst [vmem:[#allocation2 + $0x68] sm:$0xff] %v236
    %263 = vst [vmem:[#allocation2 + $0x70] sm:$0xff] %v241
    %264 = vst [vmem:[#allocation2 + $0x78] sm:$0xff] %v246
    // Predicated region
    $region14: #{tpu_custom_call.1} parent=1 // pred_check
      _
    $region15: #{tpu_custom_call.1} parent=1 // pred_check_branch
      %266 = sbr.rel (0) target = $region17
    $region16: #{tpu_custom_call.1} parent=1 // pred_region
      %s268 = ssub.s32 2048, 2048
      %269 = vsyncadd [#allocation3], %s268
      %s270 = sshll.u32 [#allocation2], 4
      %s271 = int_to_ptr.vmem [resolvable:$true] %s270
      %276 = dma.vmem_to_hbm [thread:$0]  %s271, 2048, %s3, [#allocation3], 128, 128, 8
    $region17: #{tpu_custom_call.1} parent=1 // pred_fallthru
      _
    // Predicated region
    $region18: #{tpu_custom_call.1} parent=1 // pred_check
      _
    $region19: #{tpu_custom_call.1} parent=1 // pred_check_branch
      %278 = sbr.rel (0) target = $region21
    $region20: #{tpu_custom_call.1} parent=1 // pred_region
      %279 = dma.done [#allocation3], 2048
    $region21: #{tpu_custom_call.1} parent=1 // pred_fallthru
      _
    %280 = vsyncpa [#allocation3], 1

</llo_original>
